<compile_context>
chip_gen: v5e
topology: v5e:2x2
jax: 0.10.0
libtpu: 0.0.40
codegen_flags: <defaults>
</compile_context>

<pallas_src>
import math

import jax
import jax.numpy as jnp
from jax.experimental import pallas as pl
from jax.experimental.pallas import tpu as pltpu


def _round_up(x, m):
    return ((x + m - 1) // m) * m


def _cdiv(a, b):
    return -(-a // b)


# Cache of sinusoidal frequency tables keyed by (half, max_period).
_FREQS_CACHE = {}


def _get_freqs(half, max_period):
    key = (half, max_period)
    if key not in _FREQS_CACHE:
        _FREQS_CACHE[key] = jnp.exp(
            -math.log(max_period) * jnp.arange(half, dtype=jnp.float32) / half
        ).reshape(1, half)
    return _FREQS_CACHE[key]


def _vmem_capacity_bytes():
    try:
        return int(pltpu.get_tpu_info().vmem_capacity_bytes)
    except Exception:
        return 64 << 20  # v7x per-TensorCore worst case


def _prefer_split_first_gemm():
    # v5e's MXU is 128x128: two K=half dots are its natural shape.  v6e/v7x
    # have a 256-deep MXU, so a single fused K=2*half dot fills the array.
    try:
        kind = jax.devices()[0].device_kind.lower()
    except Exception:
        return False
    return any(v in kind for v in ("v2", "v3", "v4", "v5"))


def _kernel_fused(t_ref, freqs_ref, w1_ref, b1_ref, w2_ref, b2_ref, o_ref):
    # t_ref:    (blk_n, 1)        f32
    # freqs_ref:(1, half)         f32
    # w1_ref:   (2*half, H)       compute_dtype
    # b1_ref:   (1, H)            f32
    # w2_ref:   (H, H)            compute_dtype
    # b2_ref:   (1, H)            f32
    # o_ref:    (blk_n, H)        out_dtype
    t = t_ref[...]                       # (blk_n, 1)
    freqs = freqs_ref[...]               # (1, half)
    args = t * freqs                     # (blk_n, half) outer product
    cdt = w1_ref.dtype
    # [cos | sin] placed lane-contiguously (half is a multiple of 128 for the
    # default freq_dim=256) -> single K=2*half MXU dot (v6e/v7x 256-deep MXU).
    emb = jnp.concatenate(
        [jnp.cos(args).astype(cdt), jnp.sin(args).astype(cdt)], axis=-1)
    h = (jnp.dot(emb, w1_ref[...], preferred_element_type=jnp.float32)
         + b1_ref[...])                  # (blk_n, H) f32
    # SiLU in f32.  (If a bundle dump ever shows the EUP slot saturating at
    # large N, 0.5*(tanh(0.5*h)+1) is a one-transcendental alternative.)
    h = h * jax.nn.sigmoid(h)
    out = (jnp.dot(h.astype(w2_ref.dtype), w2_ref[...],
                   preferred_element_type=jnp.float32) + b2_ref[...])
    o_ref[...] = out.astype(o_ref.dtype)


def _kernel_split(t_ref, freqs_ref, w1c_ref, w1s_ref, b1_ref, w2_ref, b2_ref,
                  o_ref):
    # Split-weight form of cat([cos, sin]) @ w1 (natural shape for v5e's
    # 128x128 MXU; avoids the 256-wide embedding relayout there).
    t = t_ref[...]
    freqs = freqs_ref[...]
    args = t * freqs
    cos_e = jnp.cos(args).astype(w1c_ref.dtype)
    sin_e = jnp.sin(args).astype(w1s_ref.dtype)
    h = (jnp.dot(cos_e, w1c_ref[...], preferred_element_type=jnp.float32)
         + jnp.dot(sin_e, w1s_ref[...], preferred_element_type=jnp.float32)
         + b1_ref[...])
    h = h * jax.nn.sigmoid(h)
    out = (jnp.dot(h.astype(w2_ref.dtype), w2_ref[...],
                   preferred_element_type=jnp.float32) + b2_ref[...])
    o_ref[...] = out.astype(o_ref.dtype)


def timestep_embedder(t, w1, b1, w2, b2, *, frequency_embedding_size=256,
                      max_period=10000, block_n=512,
                      compute_dtype=jnp.bfloat16, out_dtype=jnp.float32,
                      fuse_first_gemm=None):
    """t: (N,) float timesteps. w1: (freq_dim, H), w2: (H, H). -> (N, H)."""
    n = t.shape[0]
    hidden_size = w1.shape[1]
    # TODO(synk): the odd-frequency_embedding_size zero-pad branch of the
    # reference is not handled (never taken for the default 256).
    assert frequency_embedding_size % 2 == 0, "odd freq_dim not supported"
    half = frequency_embedding_size // 2
    assert w1.shape[0] == 2 * half and w2.shape == (hidden_size, hidden_size)

    if fuse_first_gemm is None:
        fuse_first_gemm = not _prefer_split_first_gemm()

    freqs = _get_freqs(half, max_period)

    # Row-block size: multiple of 8 (sublane).  For N > block_n split into
    # several roughly equal steps: less padding waste, and the "parallel"
    # grid axis lets megacore chips shard steps across TensorCores (each core
    # re-fetches the few-hundred-KB weights, cheap once N*H compute is large).
    block_n = _round_up(max(block_n, 8), 8)
    n8 = _round_up(n, 8)
    if n8 <= block_n:
        blk_n, n_steps = n8, 1
    else:
        n_steps = _cdiv(n8, block_n)
        blk_n = _round_up(_cdiv(n, n_steps), 8)
    n_pad = blk_n * n_steps

    t2d = t.astype(jnp.float32).reshape(n, 1)
    if n_pad != n:
        # Padded rows compute garbage but are sliced off before returning
        # (the grid axis is purely parallel; nothing reduces over it).
        t2d = jnp.pad(t2d, ((0, n_pad - n), (0, 0)))

    b1_2d = b1.reshape(1, hidden_size).astype(jnp.float32)
    b2_2d = b2.reshape(1, hidden_size).astype(jnp.float32)
    # TODO(synk): for very large hidden_size (>= ~3072) on v7x, w2 would need
    # a column-tiled second grid axis instead of staying fully resident.
    w2c = w2.astype(compute_dtype)

    cbytes = jnp.dtype(compute_dtype).itemsize
    obytes = jnp.dtype(out_dtype).itemsize

    # --- VMEM budget --------------------------------------------------------
    # Single-buffered resident operands + double-buffered t/out streams +
    # in-body temporaries; ~25% slack; clamped to 75% of physical VMEM
    # (v7x has only 64 MiB per TensorCore, so never ask for 100 MiB).
    weight_vmem = ((2 * half * hidden_size + hidden_size * hidden_size) * cbytes
                   + (2 * hidden_size + half) * 4)
    stream_vmem = 2 * blk_n * (4 + hidden_size * obytes)
    temp_vmem = blk_n * (2 * half * (4 + cbytes) + 3 * hidden_size * 4)
    vmem_est = weight_vmem + stream_vmem + temp_vmem
    vmem_limit = int(min(max(vmem_est * 5 // 4, 16 << 20),
                         (_vmem_capacity_bytes() * 3) // 4))

    # Constant-index-map blocks: fetched once, single-buffered (no pointless
    # double-buffer allocation for operands that never change).
    def resident(shape):
        return pl.BlockSpec(shape, lambda i: (0, 0),
                            pipeline_mode=pl.Buffered(1))

    t_spec = pl.BlockSpec((blk_n, 1), lambda i: (i, 0))
    out_spec = pl.BlockSpec((blk_n, hidden_size), lambda i: (i, 0))

    if fuse_first_gemm:
        kernel = _kernel_fused
        w1_args = (w1.astype(compute_dtype),)
        w1_specs = [resident((2 * half, hidden_size))]
    else:
        kernel = _kernel_split
        w1_args = (w1[:half].astype(compute_dtype),
                   w1[half:].astype(compute_dtype))
        w1_specs = [resident((half, hidden_size)),
                    resident((half, hidden_size))]

    cost = pl.CostEstimate(
        flops=int(n_pad * (4 * half * hidden_size            # emb @ w1
                           + 2 * hidden_size * hidden_size   # h @ w2
                           + 6 * hidden_size)),               # bias + SiLU
        transcendentals=int(n_pad * (2 * half + hidden_size)),
        bytes_accessed=int(weight_vmem + n_pad * (4 + hidden_size * obytes)),
    )

    out = pl.pallas_call(
        kernel,
        out_shape=jax.ShapeDtypeStruct((n_pad, hidden_size), out_dtype),
        grid_spec=pl.GridSpec(
            grid=(n_steps,),
            in_specs=[t_spec,                              # t row tile
                      resident((1, half)),                 # freqs
                      *w1_specs,                           # w1 (fused or split)
                      resident((1, hidden_size)),          # b1
                      resident((hidden_size, hidden_size)),# w2
                      resident((1, hidden_size))],         # b2
            out_specs=out_spec,
        ),
        compiler_params=pltpu.CompilerParams(
            dimension_semantics=("parallel",),
            vmem_limit_bytes=vmem_limit,
        ),
        cost_estimate=cost,
    )(t2d, freqs, *w1_args, b1_2d, w2c, b2_2d)

    return out[:n] if n_pad != n else out


def _reference(t, w1, b1, w2, b2, freq_dim, max_period, compute_dtype):
    """Pure-JAX reference matching the kernel's numerics (same casts)."""
    half = freq_dim // 2
    freqs = jnp.exp(
        -math.log(max_period) * jnp.arange(half, dtype=jnp.float32) / half)
    args = t.astype(jnp.float32)[:, None] * freqs[None]
    emb = jnp.concatenate([jnp.cos(args), jnp.sin(args)], axis=-1)
    h = (jnp.dot(emb.astype(compute_dtype), w1.astype(compute_dtype),
                 preferred_element_type=jnp.float32)
         + b1.astype(jnp.float32))
    h = h * jax.nn.sigmoid(h)
    out = (jnp.dot(h.astype(compute_dtype), w2.astype(compute_dtype),
                   preferred_element_type=jnp.float32)
           + b2.astype(jnp.float32))
    return out


if __name__ == "__main__":
    N = 8
    FREQ = 256
    HIDDEN = 128

    key = jax.random.PRNGKey(0)
    k_t, k_w1, k_b1, k_w2, k_b2 = jax.random.split(key, 5)

    # Deterministic synthetic parameters (stored as (in, out)).
    t = jax.random.uniform(k_t, (N,), jnp.float32, minval=0.0, maxval=1000.0)
    w1 = jax.random.normal(k_w1, (FREQ, HIDDEN), jnp.float32) * 0.02
    b1 = jax.random.normal(k_b1, (HIDDEN,), jnp.float32) * 0.02
    w2 = jax.random.normal(k_w2, (HIDDEN, HIDDEN), jnp.float32) * 0.02
    b2 = jax.random.normal(k_b2, (HIDDEN,), jnp.float32) * 0.02

    # 1) Default path (bf16 weights, generation-selected first-GEMM form).
    out = timestep_embedder(t, w1, b1, w2, b2, frequency_embedding_size=FREQ)
    jax.block_until_ready(out)
    assert out.shape == (N, HIDDEN), out.shape
    ref_bf16 = _reference(t, w1, b1, w2, b2, FREQ, 10000, jnp.bfloat16)
    assert jnp.allclose(out, ref_bf16, atol=1e-2, rtol=1e-2), \
        float(jnp.max(jnp.abs(out - ref_bf16)))

    # 2) f32 path -- tight check against the exact PyTorch-equivalent math.
    out_f32 = timestep_embedder(t, w1, b1, w2, b2,
                                frequency_embedding_size=FREQ,
                                compute_dtype=jnp.float32)
    jax.block_until_ready(out_f32)
    ref_f32 = _reference(t, w1, b1, w2, b2, FREQ, 10000, jnp.float32)
    assert jnp.allclose(out_f32, ref_f32, atol=1e-4, rtol=1e-4), \
        float(jnp.max(jnp.abs(out_f32 - ref_f32)))

    # 3) Non-multiple-of-block N: exercises the multi-step row grid + padding.
    N2 = 40
    t2 = jax.random.uniform(jax.random.PRNGKey(1), (N2,), jnp.float32,
                            minval=0.0, maxval=1000.0)
    out2 = timestep_embedder(t2, w1, b1, w2, b2,
                             frequency_embedding_size=FREQ, block_n=16)
    jax.block_until_ready(out2)
    ref2 = _reference(t2, w1, b1, w2, b2, FREQ, 10000, jnp.bfloat16)
    assert out2.shape == (N2, HIDDEN), out2.shape
    assert jnp.allclose(out2, ref2, atol=1e-2, rtol=1e-2), \
        float(jnp.max(jnp.abs(out2 - ref2)))

    # 4) Both first-GEMM forms compile and agree regardless of chip generation.
    for fuse in (True, False):
        out3 = timestep_embedder(t, w1, b1, w2, b2,
                                 frequency_embedding_size=FREQ,
                                 fuse_first_gemm=fuse)
        jax.block_until_ready(out3)
        assert jnp.allclose(out3, ref_bf16, atol=1e-2, rtol=1e-2)

    print("KERNEL_OK")
</pallas_src>

<mosaic_0001>
module attributes {stable_mosaic.version = 11 : i64} {
  func.func @_kernel_fused(%arg0: i32, %arg1: memref<8x1xf32, #tpu.memory_space<vmem>>, %arg2: memref<1x128xf32, #tpu.memory_space<vmem>>, %arg3: memref<256x128xbf16, #tpu.memory_space<vmem>>, %arg4: memref<1x128xf32, #tpu.memory_space<vmem>>, %arg5: memref<128x128xbf16, #tpu.memory_space<vmem>>, %arg6: memref<1x128xf32, #tpu.memory_space<vmem>>, %arg7: memref<8x128xf32, #tpu.memory_space<vmem>>) attributes {dimension_semantics = [#tpu.dimension_semantics<parallel>], iteration_bounds = array<i64: 1>, scalar_prefetch = 0 : i64, scratch_operands = 0 : i64, tpu.core_type = #tpu.core_type<tc>, window_params = [{transform_indices = @transform_0, window_bounds = array<i64: 8, 1>}, {pipeline_mode = #tpu.pipeline_mode<synchronous>, transform_indices = @transform_1, window_bounds = array<i64: 1, 128>}, {pipeline_mode = #tpu.pipeline_mode<synchronous>, transform_indices = @transform_2, window_bounds = array<i64: 256, 128>}, {pipeline_mode = #tpu.pipeline_mode<synchronous>, transform_indices = @transform_3, window_bounds = array<i64: 1, 128>}, {pipeline_mode = #tpu.pipeline_mode<synchronous>, transform_indices = @transform_4, window_bounds = array<i64: 128, 128>}, {pipeline_mode = #tpu.pipeline_mode<synchronous>, transform_indices = @transform_5, window_bounds = array<i64: 1, 128>}, {transform_indices = @transform_6, window_bounds = array<i64: 8, 128>}]} {
    %c0 = arith.constant 0 : index
    %c0_0 = arith.constant 0 : index
    %0 = vector.load %arg1[%c0, %c0_0] : memref<8x1xf32, #tpu.memory_space<vmem>>, vector<8x1xf32>
    %c0_1 = arith.constant 0 : index
    %c0_2 = arith.constant 0 : index
    %1 = vector.load %arg2[%c0_1, %c0_2] : memref<1x128xf32, #tpu.memory_space<vmem>>, vector<1x128xf32>
    %2 = vector.broadcast %0 : vector<8x1xf32> to vector<8x128xf32>
    %3 = vector.broadcast %1 : vector<1x128xf32> to vector<8x128xf32>
    %4 = arith.mulf %2, %3 : vector<8x128xf32>
    %5 = math.cos %4 : vector<8x128xf32>
    %6 = arith.truncf %5 : vector<8x128xf32> to vector<8x128xbf16>
    %7 = math.sin %4 : vector<8x128xf32>
    %8 = arith.truncf %7 : vector<8x128xf32> to vector<8x128xbf16>
    %9 = tpu.concatenate %6, %8 in 1 : vector<8x128xbf16>, vector<8x128xbf16> -> vector<8x256xbf16>
    %c0_3 = arith.constant 0 : index
    %c0_4 = arith.constant 0 : index
    %10 = vector.load %arg3[%c0_3, %c0_4] : memref<256x128xbf16, #tpu.memory_space<vmem>>, vector<256x128xbf16>
    %cst = arith.constant dense<0.000000e+00> : vector<8x128xf32>
    %11 = tpu.matmul %9, %10, %cst {dimension_numbers = #tpu.dot_dimension_numbers<[1], [0], [0], [1], [0, 0, 1, 1], [], []>} : vector<8x256xbf16>, vector<256x128xbf16>, vector<8x128xf32> -> vector<8x128xf32>
    %c0_5 = arith.constant 0 : index
    %c0_6 = arith.constant 0 : index
    %12 = vector.load %arg4[%c0_5, %c0_6] : memref<1x128xf32, #tpu.memory_space<vmem>>, vector<1x128xf32>
    %13 = vector.broadcast %12 : vector<1x128xf32> to vector<8x128xf32>
    %14 = arith.addf %11, %13 : vector<8x128xf32>
    %15 = arith.negf %14 : vector<8x128xf32>
    %16 = math.exp %15 : vector<8x128xf32>
    %cst_7 = arith.constant 1.000000e+00 : f32
    %17 = vector.broadcast %cst_7 : f32 to vector<8x128xf32>
    %18 = arith.addf %17, %16 : vector<8x128xf32>
    %19 = arith.divf %17, %18 : vector<8x128xf32>
    %20 = arith.mulf %14, %19 : vector<8x128xf32>
    %21 = arith.truncf %20 : vector<8x128xf32> to vector<8x128xbf16>
    %c0_8 = arith.constant 0 : index
    %c0_9 = arith.constant 0 : index
    %22 = vector.load %arg5[%c0_8, %c0_9] : memref<128x128xbf16, #tpu.memory_space<vmem>>, vector<128x128xbf16>
    %cst_10 = arith.constant dense<0.000000e+00> : vector<8x128xf32>
    %23 = tpu.matmul %21, %22, %cst_10 {dimension_numbers = #tpu.dot_dimension_numbers<[1], [0], [0], [1], [0, 0, 1, 1], [], []>} : vector<8x128xbf16>, vector<128x128xbf16>, vector<8x128xf32> -> vector<8x128xf32>
    %c0_11 = arith.constant 0 : index
    %c0_12 = arith.constant 0 : index
    %24 = vector.load %arg6[%c0_11, %c0_12] : memref<1x128xf32, #tpu.memory_space<vmem>>, vector<1x128xf32>
    %25 = vector.broadcast %24 : vector<1x128xf32> to vector<8x128xf32>
    %26 = arith.addf %23, %25 : vector<8x128xf32>
    %c0_13 = arith.constant 0 : index
    %c0_14 = arith.constant 0 : index
    %27 = vector.load %arg7[%c0_13, %c0_14] : memref<8x128xf32, #tpu.memory_space<vmem>>, vector<8x128xf32>
    tpu.vector_store %arg7[%c0_13, %c0_14], %26 {strides = array<i32>} : memref<8x128xf32, #tpu.memory_space<vmem>>, vector<8x128xf32>,
    return
  }
  func.func @transform_0(%arg0: i32) -> (i32, i32) {
    %c0_i32 = arith.constant 0 : i32
    %c0_i32_0 = arith.constant 0 : i32
    return %arg0, %c0_i32 : i32, i32
  }
  func.func @transform_1(%arg0: i32) -> (i32, i32) {
    %c0_i32 = arith.constant 0 : i32
    %c0_i32_0 = arith.constant 0 : i32
    %c0_i32_1 = arith.constant 0 : i32
    return %c0_i32, %c0_i32_0 : i32, i32
  }
  func.func @transform_2(%arg0: i32) -> (i32, i32) {
    %c0_i32 = arith.constant 0 : i32
    %c0_i32_0 = arith.constant 0 : i32
    %c0_i32_1 = arith.constant 0 : i32
    return %c0_i32, %c0_i32_0 : i32, i32
  }
  func.func @transform_3(%arg0: i32) -> (i32, i32) {
    %c0_i32 = arith.constant 0 : i32
    %c0_i32_0 = arith.constant 0 : i32
    %c0_i32_1 = arith.constant 0 : i32
    return %c0_i32, %c0_i32_0 : i32, i32
  }
  func.func @transform_4(%arg0: i32) -> (i32, i32) {
    %c0_i32 = arith.constant 0 : i32
    %c0_i32_0 = arith.constant 0 : i32
    %c0_i32_1 = arith.constant 0 : i32
    return %c0_i32, %c0_i32_0 : i32, i32
  }
  func.func @transform_5(%arg0: i32) -> (i32, i32) {
    %c0_i32 = arith.constant 0 : i32
    %c0_i32_0 = arith.constant 0 : i32
    %c0_i32_1 = arith.constant 0 : i32
    return %c0_i32, %c0_i32_0 : i32, i32
  }
  func.func @transform_6(%arg0: i32) -> (i32, i32) {
    %c0_i32 = arith.constant 0 : i32
    %c0_i32_0 = arith.constant 0 : i32
    return %arg0, %c0_i32 : i32, i32
  }
}

</mosaic_0001>

<llo_original>
// kernel: tpu_custom_call.1
$region0: #{tpu_custom_call.1}
  #allocation0 [shape = 'u32[]', space=smem, size = 0x4, offset = 0x4, fixed_abs, tag = 'smem constant byte address 0x4 - core index']
  #allocation1 [shape = 'u32[72,128]{1,0:T(1,128)}', space=vmem, size = 0x9000, scoped, tag = 'internal scratch']
  %s0 = inlined_call_operand.vmem [shape: f32[8,1], index: 0, kind: input, shape index: {}]
  %s1 = inlined_call_operand.vmem [shape: f32[1,128], index: 1, kind: input, shape index: {}]
  %s2 = inlined_call_operand.hbm [shape: bf16[256,128], index: 2, kind: input, shape index: {}]
  %s3 = inlined_call_operand.vmem [shape: f32[1,128], index: 3, kind: input, shape index: {}]
  %s4 = inlined_call_operand.hbm [shape: bf16[128,128], index: 4, kind: input, shape index: {}]
  %s5 = inlined_call_operand.vmem [shape: f32[1,128], index: 5, kind: input, shape index: {}]
  %s6 = inlined_call_operand.hbm [shape: f32[8,128], index: 6, kind: output, shape index: {}]
  %s7 = sld [smem:[#allocation0]]
  $region42: #{tpu_custom_call.1} parent=0
    _
  %s9 = ssub.s32 1, %s7
  %s10 = scalar_select 0, %s9, %s7
  $region1: #{tpu_custom_call.1} parent=0
    #allocation2 [shape = 'u8[65536]{0}', space=vmem, size = 0x10000, scoped, tag = 'input window, operand 2, single buffered']
    #allocation3 [shape = 's32[1]{0}', space=sflag, size = 0x4, scoped, tag = 'scoped memory for tpu_custom_call.1']
    #allocation4 [shape = 's32[1]{0}', space=sflag, size = 0x4, scoped, tag = 'scoped memory for tpu_custom_call.1']
    #allocation5 [shape = 'u8[32768]{0}', space=vmem, size = 0x8000, scoped, tag = 'input window, operand 4, single buffered']
    #allocation6 [shape = 's32[1]{0}', space=sflag, size = 0x4, scoped, tag = 'scoped memory for tpu_custom_call.1']
    #allocation7 [shape = 'u8[4096]{0}', space=vmem, size = 0x1000, scoped, tag = 'output window, operand 0, single buffered']
    %11 = vsyncpa [#allocation3], 0
    %12 = vsyncpa [#allocation6], 0
    %13 = vsyncpa [#allocation4], 0
    // Predicated region
    $region2: #{tpu_custom_call.1} parent=1 // pred_check
      _
    $region3: #{tpu_custom_call.1} parent=1 // pred_check_branch
      %15 = sbr.rel (0) target = $region5
    $region4: #{tpu_custom_call.1} parent=1 // pred_region
      _
    $region5: #{tpu_custom_call.1} parent=1 // pred_fallthru
      _
    // Predicated region
    $region6: #{tpu_custom_call.1} parent=1 // pred_check
      _
    $region7: #{tpu_custom_call.1} parent=1 // pred_check_branch
      %17 = sbr.rel (0) target = $region9
    $region8: #{tpu_custom_call.1} parent=1 // pred_region
      _
    $region9: #{tpu_custom_call.1} parent=1 // pred_fallthru
      _
    // Predicated region
    $region10: #{tpu_custom_call.1} parent=1 // pred_check
      _
    $region11: #{tpu_custom_call.1} parent=1 // pred_check_branch
      %19 = sbr.rel (0) target = $region13
    $region12: #{tpu_custom_call.1} parent=1 // pred_region
      %21 = vsyncadd [#allocation3], 0
      %s22 = sshll.u32 %s2, 4
      %s23 = int_to_ptr.hbm [resolvable:$true] %s22
      %s24 = sshll.u32 [#allocation2], 4
      %s25 = int_to_ptr.vmem [resolvable:$true] %s24
      %30 = dma.hbm_to_vmem [thread:$0]  %s23, 2048, %s25, [#allocation3], 64, 64, 4
    $region13: #{tpu_custom_call.1} parent=1 // pred_fallthru
      _
    // Predicated region
    $region14: #{tpu_custom_call.1} parent=1 // pred_check
      _
    $region15: #{tpu_custom_call.1} parent=1 // pred_check_branch
      %32 = sbr.rel (0) target = $region17
    $region16: #{tpu_custom_call.1} parent=1 // pred_region
      _
    $region17: #{tpu_custom_call.1} parent=1 // pred_fallthru
      _
    // Predicated region
    $region18: #{tpu_custom_call.1} parent=1 // pred_check
      _
    $region19: #{tpu_custom_call.1} parent=1 // pred_check_branch
      %34 = sbr.rel (0) target = $region21
    $region20: #{tpu_custom_call.1} parent=1 // pred_region
      %36 = vsyncadd [#allocation6], 0
      %s37 = sshll.u32 %s4, 4
      %s38 = int_to_ptr.hbm [resolvable:$true] %s37
      %s39 = sshll.u32 [#allocation5], 4
      %s40 = int_to_ptr.vmem [resolvable:$true] %s39
      %45 = dma.hbm_to_vmem [thread:$0]  %s38, 1024, %s40, [#allocation6], 64, 64, 4
    $region21: #{tpu_custom_call.1} parent=1 // pred_fallthru
      _
    // Predicated region
    $region22: #{tpu_custom_call.1} parent=1 // pred_check
      _
    $region23: #{tpu_custom_call.1} parent=1 // pred_check_branch
      %47 = sbr.rel (0) target = $region25
    $region24: #{tpu_custom_call.1} parent=1 // pred_region
      _
    $region25: #{tpu_custom_call.1} parent=1 // pred_fallthru
      _
    // Predicated region
    $region26: #{tpu_custom_call.1} parent=1 // pred_check
      _
    $region27: #{tpu_custom_call.1} parent=1 // pred_check_branch
      %49 = sbr.rel (0) target = $region29
    $region28: #{tpu_custom_call.1} parent=1 // pred_region
      %51 = dma.done [#allocation3], 2048
    $region29: #{tpu_custom_call.1} parent=1 // pred_fallthru
      _
    // Predicated region
    $region30: #{tpu_custom_call.1} parent=1 // pred_check
      _
    $region31: #{tpu_custom_call.1} parent=1 // pred_check_branch
      %53 = sbr.rel (0) target = $region33
    $region32: #{tpu_custom_call.1} parent=1 // pred_region
      %55 = dma.done [#allocation6], 1024
    $region33: #{tpu_custom_call.1} parent=1 // pred_fallthru
      _
    %v56 = vld [vmem:[%s0] sm:$0xff]
    %v57 = vld [vmem:[%s1] sm:$0x1]
    %59 = vset.pattern.permute.xlu0 0
    %60 = vperm.xlu0 %59, %v56
    %v61 = vpop.permute.xlu0 %60
    %v64 = vperm.slane %v57, 0
    %v66 = vmul.f32 %v61, %v64
    %v67 = vand.u32 2147483647, %v66
    %vm68 = vcmp.le.f32.partialorder %v67, 0.7853982
    %vm69 = vcmp.lt.s32.totalorder %v66, 0
    %v70 = vand.u32 %v66, 2139095040
    %v71 = vshrl.u32 %v70, 23
    %v72 = vsub.s32 %v71, 127
    %v73 = vand.u32 2147483647, %v66
    %v74 = vand.u32 %v73, 8388607
    %v75 = vor.u32 %v74, 8388608
    %v76 = vsub.s32 0, %v75
    %v77 = vadd.s32 %v72, 1
    %vm78 = vcmp.gt.s32.totalorder %v77, 0
    %v79 = vsel %vm78, %v77, 0
    %v80 = vshrl.u32 %v79, 5
    %v81 = vand.u32 %v79, 31
    %v82 = vsub.s32 32, %v81
    %v83 = vshrl.u32 683565275, %v82
    %v84 = vshll.u32 683565275, %v81
    %v85 = vshrl.u32 2475754826, %v82
    %v86 = vor.u32 %v84, %v85
    %v87 = vshll.u32 2475754826, %v81
    %v88 = vshrl.u32 2131351028, %v82
    %v89 = vor.u32 %v87, %v88
    %v90 = vshll.u32 2131351028, %v81
    %v91 = vshrl.u32 2102212464, %v82
    %v92 = vor.u32 %v90, %v91
    %v93 = vshll.u32 2102212464, %v81
    %v94 = vshrl.u32 920167782, %v82
    %v95 = vor.u32 %v93, %v94
    %v96 = vshll.u32 920167782, %v81
    %v97 = vshrl.u32 1326507024, %v82
    %v98 = vor.u32 %v96, %v97
    %vm99 = vcmp.lt.s32.totalorder %v80, 1
    %vm100 = vcmp.lt.s32.totalorder %v80, 2
    %vm101 = vcmp.lt.s32.totalorder %v80, 3
    %vm102 = vcmp.lt.s32.totalorder %v80, 4
    %v103 = vsel %vm99, %v83, %v86
    %v104 = vsel %vm102, %v92, 2102212464
    %v105 = vsel %vm101, %v89, %v104
    %v106 = vsel %vm100, %v103, %v105
    %v107 = vsel %vm99, %v86, %v89
    %v108 = vsel %vm102, %v95, 920167782
    %v109 = vsel %vm101, %v92, %v108
    %v110 = vsel %vm100, %v107, %v109
    %v111 = vsel %vm99, %v89, %v92
    %v112 = vsel %vm102, %v98, 1326507024
    %v113 = vsel %vm101, %v95, %v112
    %v114 = vsel %vm100, %v111, %v113
    %v115 = vshll.u32 %v75, 8
    %v116 = vand.u32 %v115, 65535
    %v117 = vshrl.u32 %v115, 16
    %v118 = vand.u32 %v114, 65535
    %v119 = vshrl.u32 %v114, 16
    %v120 = vmul.u32 %v116, %v118
    %v121 = vmul.u32 %v116, %v119
    %v122 = vmul.u32 %v117, %v118
    %v123 = vmul.u32 %v117, %v119
    %v124 = vshll.u32 %v121, 16
    %v125 = vshrl.u32 %v121, 16
    %v126 = vshll.u32 %v122, 16
    %v127 = vshrl.u32 %v122, 16
    %vm128 = vc.u32 %v120, %v124
    %v129 = vsel %vm128, 1, 0
    %v130 = vadd.s32 %v120, %v124
    %v131 = vadd.s32 %v123, %v129
    %vm132 = vc.u32 %v130, %v126
    %v133 = vsel %vm132, 1, 0
    %v134 = vadd.s32 %v130, %v126
    %v135 = vadd.s32 %v131, %v133
    %v136 = vadd.s32 %v135, %v125
    %v137 = vadd.s32 %v136, %v127
    %v138 = vand.u32 %v115, 65535
    %v139 = vshrl.u32 %v115, 16
    %v140 = vand.u32 %v110, 65535
    %v141 = vshrl.u32 %v110, 16
    %v142 = vmul.u32 %v138, %v140
    %v143 = vmul.u32 %v138, %v141
    %v144 = vmul.u32 %v139, %v140
    %v145 = vmul.u32 %v139, %v141
    %v146 = vshll.u32 %v143, 16
    %v147 = vshrl.u32 %v143, 16
    %v148 = vshll.u32 %v144, 16
    %v149 = vshrl.u32 %v144, 16
    %vm150 = vc.u32 %v142, %v146
    %v151 = vsel %vm150, 1, 0
    %v152 = vadd.s32 %v142, %v146
    %v153 = vadd.s32 %v145, %v151
    %vm154 = vc.u32 %v152, %v148
    %v155 = vsel %vm154, 1, 0
    %v156 = vadd.s32 %v152, %v148
    %v157 = vadd.s32 %v153, %v155
    %v158 = vadd.s32 %v157, %v147
    %v159 = vadd.s32 %v158, %v149
    %v160 = vmul.u32 %v115, %v106
    %v161 = vadd.s32 %v137, %v156
    %vm162 = vc.u32 %v137, %v156
    %v163 = vadd.s32 %v159, 1
    %v164 = vsel %vm162, %v163, %v159
    %v165 = vadd.s32 %v160, %v164
    %v166 = vadd.s32 %v165, 536870912
    %v167 = vshrl.u32 %v166, 30
    %v168 = vshll.u32 %v167, 30
    %v169 = vsub.s32 %v165, %v168
    %vm170 = vcmp.lt.s32.totalorder %v169, 0
    %v171 = vsub.s32 0, %v169
    %v172 = vsel %vm170, %v171, %v169
    %v173 = vclz %v172
    %v174 = vsub.s32 %v173, 2
    %vm175 = vcmp.gt.s32.totalorder 0, %v174
    %v176 = vsel %vm175, 0, %v174
    %v177 = vsub.s32 32, %v176
    %v178 = vshll.u32 %v169, %v176
    %v179 = vshrl.u32 %v161, %v177
    %v180 = vor.u32 %v178, %v179
    %v181 = vsub.s32 4294967266, %v176
    %v182 = vadd.s32 %v181, 127
    %v183 = vshll.u32 %v182, 23
    %v184 = vor.u32 4788187, %v183
    %v185 = vand.u32 2147483647, %v184
    %v187 = vcvt.s32.f32 %v180
    %v188 = vmul.f32 %v187, %v185
    %v189 = vxor.u32 %v188, 2147483648
    %v190 = vsel %vm69, %v189, %v188
    %v191 = vsub.s32 4, %v167
    %v192 = vsel %vm69, %v191, %v167
    %v193 = vsel %vm68, %v66, %v190
    %v194 = vsel %vm68, 0, %v192
    %v195 = vmul.f32 %v193, %v193
    %v196 = vmul.f32 %v195, -0.001358992
    %v197 = vadd.f32 %v196, 0.041655596
    %v198 = vmul.f32 %v195, %v197
    %v199 = vadd.f32 %v198, -0.4999988
    %v200 = vmul.f32 %v195, %v199
    %v201 = vadd.f32 1.0, %v200
    %v202 = vmul.f32 %v193, %v193
    %v203 = vmul.f32 %v202, -0.00019511016
    %v204 = vadd.f32 %v203, 0.008332121
    %v205 = vmul.f32 %v202, %v204
    %v206 = vadd.f32 %v205, -0.16666654
    %v207 = vmul.f32 %v202, %v206
    %v208 = vadd.f32 %v207, 1.0
    %v209 = vmul.f32 %v208, %v193
    %vm210 = vweird.f32 %v66
    %v211 = vand.u32 %v194, 3
    %vm212 = vcmp.lt.s32.totalorder %v211, 2
    %vm213 = vcmp.eq.s32.totalorder %v211, 0
    %v214 = vxor.u32 %v209, 2147483648
    %v215 = vsel %vm213, %v201, %v214
    %vm216 = vcmp.eq.s32.totalorder %v211, 2
    %v217 = vxor.u32 %v201, 2147483648
    %v218 = vsel %vm216, %v217, %v209
    %v219 = vsel %vm212, %v215, %v218
    %v220 = vsel %vm210, nan, %v219
    %v221 = vpack.c.bf16 %v220, %v220
    %v222 = vand.u32 2147483647, %v66
    %vm223 = vcmp.le.f32.partialorder %v222, 0.7853982
    %vm224 = vcmp.lt.s32.totalorder %v66, 0
    %v225 = vand.u32 %v66, 2139095040
    %v226 = vshrl.u32 %v225, 23
    %v227 = vsub.s32 %v226, 127
    %v228 = vand.u32 2147483647, %v66
    %v229 = vand.u32 %v228, 8388607
    %v230 = vor.u32 %v229, 8388608
    %v231 = vsub.s32 0, %v230
    %v232 = vadd.s32 %v227, 1
    %vm233 = vcmp.gt.s32.totalorder %v232, 0
    %v234 = vsel %vm233, %v232, 0
    %v235 = vshrl.u32 %v234, 5
    %v236 = vand.u32 %v234, 31
    %v237 = vsub.s32 32, %v236
    %v238 = vshrl.u32 683565275, %v237
    %v239 = vshll.u32 683565275, %v236
    %v240 = vshrl.u32 2475754826, %v237
    %v241 = vor.u32 %v239, %v240
    %v242 = vshll.u32 2475754826, %v236
    %v243 = vshrl.u32 2131351028, %v237
    %v244 = vor.u32 %v242, %v243
    %v245 = vshll.u32 2131351028, %v236
    %v246 = vshrl.u32 2102212464, %v237
    %v247 = vor.u32 %v245, %v246
    %v248 = vshll.u32 2102212464, %v236
    %v249 = vshrl.u32 920167782, %v237
    %v250 = vor.u32 %v248, %v249
    %v251 = vshll.u32 920167782, %v236
    %v252 = vshrl.u32 1326507024, %v237
    %v253 = vor.u32 %v251, %v252
    %vm254 = vcmp.lt.s32.totalorder %v235, 1
    %vm255 = vcmp.lt.s32.totalorder %v235, 2
    %vm256 = vcmp.lt.s32.totalorder %v235, 3
    %vm257 = vcmp.lt.s32.totalorder %v235, 4
    %v258 = vsel %vm254, %v238, %v241
    %v259 = vsel %vm257, %v247, 2102212464
    %v260 = vsel %vm256, %v244, %v259
    %v261 = vsel %vm255, %v258, %v260
    %v262 = vsel %vm254, %v241, %v244
    %v263 = vsel %vm257, %v250, 920167782
    %v264 = vsel %vm256, %v247, %v263
    %v265 = vsel %vm255, %v262, %v264
    %v266 = vsel %vm254, %v244, %v247
    %v267 = vsel %vm257, %v253, 1326507024
    %v268 = vsel %vm256, %v250, %v267
    %v269 = vsel %vm255, %v266, %v268
    %v270 = vshll.u32 %v230, 8
    %v271 = vand.u32 %v270, 65535
    %v272 = vshrl.u32 %v270, 16
    %v273 = vand.u32 %v269, 65535
    %v274 = vshrl.u32 %v269, 16
    %v275 = vmul.u32 %v271, %v273
    %v276 = vmul.u32 %v271, %v274
    %v277 = vmul.u32 %v272, %v273
    %v278 = vmul.u32 %v272, %v274
    %v279 = vshll.u32 %v276, 16
    %v280 = vshrl.u32 %v276, 16
    %v281 = vshll.u32 %v277, 16
    %v282 = vshrl.u32 %v277, 16
    %vm283 = vc.u32 %v275, %v279
    %v284 = vsel %vm283, 1, 0
    %v285 = vadd.s32 %v275, %v279
    %v286 = vadd.s32 %v278, %v284
    %vm287 = vc.u32 %v285, %v281
    %v288 = vsel %vm287, 1, 0
    %v289 = vadd.s32 %v285, %v281
    %v290 = vadd.s32 %v286, %v288
    %v291 = vadd.s32 %v290, %v280
    %v292 = vadd.s32 %v291, %v282
    %v293 = vand.u32 %v270, 65535
    %v294 = vshrl.u32 %v270, 16
    %v295 = vand.u32 %v265, 65535
    %v296 = vshrl.u32 %v265, 16
    %v297 = vmul.u32 %v293, %v295
    %v298 = vmul.u32 %v293, %v296
    %v299 = vmul.u32 %v294, %v295
    %v300 = vmul.u32 %v294, %v296
    %v301 = vshll.u32 %v298, 16
    %v302 = vshrl.u32 %v298, 16
    %v303 = vshll.u32 %v299, 16
    %v304 = vshrl.u32 %v299, 16
    %vm305 = vc.u32 %v297, %v301
    %v306 = vsel %vm305, 1, 0
    %v307 = vadd.s32 %v297, %v301
    %v308 = vadd.s32 %v300, %v306
    %vm309 = vc.u32 %v307, %v303
    %v310 = vsel %vm309, 1, 0
    %v311 = vadd.s32 %v307, %v303
    %v312 = vadd.s32 %v308, %v310
    %v313 = vadd.s32 %v312, %v302
    %v314 = vadd.s32 %v313, %v304
    %v315 = vmul.u32 %v270, %v261
    %v316 = vadd.s32 %v292, %v311
    %vm317 = vc.u32 %v292, %v311
    %v318 = vadd.s32 %v314, 1
    %v319 = vsel %vm317, %v318, %v314
    %v320 = vadd.s32 %v315, %v319
    %v321 = vadd.s32 %v320, 536870912
    %v322 = vshrl.u32 %v321, 30
    %v323 = vshll.u32 %v322, 30
    %v324 = vsub.s32 %v320, %v323
    %vm325 = vcmp.lt.s32.totalorder %v324, 0
    %v326 = vsub.s32 0, %v324
    %v327 = vsel %vm325, %v326, %v324
    %v328 = vclz %v327
    %v329 = vsub.s32 %v328, 2
    %vm330 = vcmp.gt.s32.totalorder 0, %v329
    %v331 = vsel %vm330, 0, %v329
    %v332 = vsub.s32 32, %v331
    %v333 = vshll.u32 %v324, %v331
    %v334 = vshrl.u32 %v316, %v332
    %v335 = vor.u32 %v333, %v334
    %v336 = vsub.s32 4294967266, %v331
    %v337 = vadd.s32 %v336, 127
    %v338 = vshll.u32 %v337, 23
    %v339 = vor.u32 4788187, %v338
    %v340 = vand.u32 2147483647, %v339
    %v342 = vcvt.s32.f32 %v335
    %v343 = vmul.f32 %v342, %v340
    %v344 = vxor.u32 %v343, 2147483648
    %v345 = vsel %vm224, %v344, %v343
    %v346 = vsub.s32 4, %v322
    %v347 = vsel %vm224, %v346, %v322
    %v348 = vsel %vm223, %v66, %v345
    %v349 = vsel %vm223, 0, %v347
    %v350 = vmul.f32 %v348, %v348
    %v351 = vmul.f32 %v350, -0.001358992
    %v352 = vadd.f32 %v351, 0.041655596
    %v353 = vmul.f32 %v350, %v352
    %v354 = vadd.f32 %v353, -0.4999988
    %v355 = vmul.f32 %v350, %v354
    %v356 = vadd.f32 1.0, %v355
    %v357 = vmul.f32 %v348, %v348
    %v358 = vmul.f32 %v357, -0.00019511016
    %v359 = vadd.f32 %v358, 0.008332121
    %v360 = vmul.f32 %v357, %v359
    %v361 = vadd.f32 %v360, -0.16666654
    %v362 = vmul.f32 %v357, %v361
    %v363 = vadd.f32 %v362, 1.0
    %v364 = vmul.f32 %v363, %v348
    %vm365 = vweird.f32 %v66
    %v366 = vadd.s32 %v349, 3
    %v367 = vand.u32 %v366, 3
    %vm368 = vcmp.lt.s32.totalorder %v367, 2
    %vm369 = vcmp.eq.s32.totalorder %v367, 0
    %v370 = vxor.u32 %v364, 2147483648
    %v371 = vsel %vm369, %v356, %v370
    %vm372 = vcmp.eq.s32.totalorder %v367, 2
    %v373 = vxor.u32 %v356, 2147483648
    %v374 = vsel %vm372, %v373, %v364
    %v375 = vsel %vm368, %v371, %v374
    %v376 = vsel %vm365, nan, %v375
    %v377 = vpack.c.bf16 %v376, %v376
    %v378 = vld [vmem:[#allocation2] sm:$0xf]
    %v379 = vld [vmem:[#allocation2 + $0x4] sm:$0xf]
    %v380 = vld [vmem:[#allocation2 + $0x8] sm:$0xf]
    %v381 = vld [vmem:[#allocation2 + $0xc] sm:$0xf]
    %v382 = vld [vmem:[#allocation2 + $0x10] sm:$0xf]
    %v383 = vld [vmem:[#allocation2 + $0x14] sm:$0xf]
    %v384 = vld [vmem:[#allocation2 + $0x18] sm:$0xf]
    %v385 = vld [vmem:[#allocation2 + $0x1c] sm:$0xf]
    %v386 = vld [vmem:[#allocation2 + $0x20] sm:$0xf]
    %v387 = vld [vmem:[#allocation2 + $0x24] sm:$0xf]
    %v388 = vld [vmem:[#allocation2 + $0x28] sm:$0xf]
    %v389 = vld [vmem:[#allocation2 + $0x2c] sm:$0xf]
    %v390 = vld [vmem:[#allocation2 + $0x30] sm:$0xf]
    %v391 = vld [vmem:[#allocation2 + $0x34] sm:$0xf]
    %v392 = vld [vmem:[#allocation2 + $0x38] sm:$0xf]
    %v393 = vld [vmem:[#allocation2 + $0x3c] sm:$0xf]
    %v394 = vld [vmem:[#allocation2 + $0x40] sm:$0xf]
    %v395 = vld [vmem:[#allocation2 + $0x44] sm:$0xf]
    %v396 = vld [vmem:[#allocation2 + $0x48] sm:$0xf]
    %v397 = vld [vmem:[#allocation2 + $0x4c] sm:$0xf]
    %v398 = vld [vmem:[#allocation2 + $0x50] sm:$0xf]
    %v399 = vld [vmem:[#allocation2 + $0x54] sm:$0xf]
    %v400 = vld [vmem:[#allocation2 + $0x58] sm:$0xf]
    %v401 = vld [vmem:[#allocation2 + $0x5c] sm:$0xf]
    %v402 = vld [vmem:[#allocation2 + $0x60] sm:$0xf]
    %v403 = vld [vmem:[#allocation2 + $0x64] sm:$0xf]
    %v404 = vld [vmem:[#allocation2 + $0x68] sm:$0xf]
    %v405 = vld [vmem:[#allocation2 + $0x6c] sm:$0xf]
    %v406 = vld [vmem:[#allocation2 + $0x70] sm:$0xf]
    %v407 = vld [vmem:[#allocation2 + $0x74] sm:$0xf]
    %v408 = vld [vmem:[#allocation2 + $0x78] sm:$0xf]
    %v409 = vld [vmem:[#allocation2 + $0x7c] sm:$0xf]
    %v410 = vld [vmem:[%s3] sm:$0x1]
    %v412 = vperm.slane %v410, 0
    %v446 = vunpack.c.l.b16 %v378
    %v447 = vunpack.c.l.b16 %v379
    %v448 = vunpack.c.l.b16 %v380
    %v449 = vunpack.c.l.b16 %v381
    %v450 = vunpack.c.l.b16 %v382
    %v451 = vunpack.c.l.b16 %v383
    %v452 = vunpack.c.l.b16 %v384
    %v453 = vunpack.c.l.b16 %v385
    %v454 = vunpack.c.l.b16 %v386
    %v455 = vunpack.c.l.b16 %v387
    %v456 = vunpack.c.l.b16 %v388
    %v457 = vunpack.c.l.b16 %v389
    %v458 = vunpack.c.l.b16 %v390
    %v459 = vunpack.c.l.b16 %v391
    %v460 = vunpack.c.l.b16 %v392
    %v461 = vunpack.c.l.b16 %v393
    %v462 = vunpack.c.l.b16 %v394
    %v463 = vunpack.c.l.b16 %v395
    %v464 = vunpack.c.l.b16 %v396
    %v465 = vunpack.c.l.b16 %v397
    %v466 = vunpack.c.l.b16 %v398
    %v467 = vunpack.c.l.b16 %v399
    %v468 = vunpack.c.l.b16 %v400
    %v469 = vunpack.c.l.b16 %v401
    %v470 = vunpack.c.l.b16 %v402
    %v471 = vunpack.c.l.b16 %v403
    %v472 = vunpack.c.l.b16 %v404
    %v473 = vunpack.c.l.b16 %v405
    %v474 = vunpack.c.l.b16 %v406
    %v475 = vunpack.c.l.b16 %v407
    %v476 = vunpack.c.l.b16 %v408
    %v477 = vunpack.c.l.b16 %v409
    %v478 = vpack.c.b16 %v447, %v446
    %v479 = vpack.c.b16 %v449, %v448
    %v480 = vpack.c.b16 %v451, %v450
    %v481 = vpack.c.b16 %v453, %v452
    %v482 = vpack.c.b16 %v455, %v454
    %v483 = vpack.c.b16 %v457, %v456
    %v484 = vpack.c.b16 %v459, %v458
    %v485 = vpack.c.b16 %v461, %v460
    %v486 = vpack.c.b16 %v463, %v462
    %v487 = vpack.c.b16 %v465, %v464
    %v488 = vpack.c.b16 %v467, %v466
    %v489 = vpack.c.b16 %v469, %v468
    %v490 = vpack.c.b16 %v471, %v470
    %v491 = vpack.c.b16 %v473, %v472
    %v492 = vpack.c.b16 %v475, %v474
    %v493 = vpack.c.b16 %v477, %v476
    %510 = vmatpush.bf16.msra.mxu0 %v485
    %511 = vmatpush.bf16.msra.mxu0 %v484
    %512 = vmatpush.bf16.msra.mxu0 %v483
    %513 = vmatpush.bf16.msra.mxu0 %v482
    %514 = vmatpush.bf16.msra.mxu0 %v481
    %515 = vmatpush.bf16.msra.mxu0 %v480
    %516 = vmatpush.bf16.msra.mxu0 %v479
    %517 = vmatpush.bf16.msra.mxu0 %v478
    %518 = vmatmul.bf16.gmra.mxu0 %v221
    %v519 = vpop.f32.mrf.mxu0
    %v520 = vadd.f32 %v412, %v519
    %v521 = vpop.f32.mrf.mxu0
    %522 = vdwg.mxu0
    %523 = vmatpush.bf16.msra.mxu0 %v493
    %524 = vmatpush.bf16.msra.mxu0 %v492
    %525 = vmatpush.bf16.msra.mxu0 %v491
    %526 = vmatpush.bf16.msra.mxu0 %v490
    %527 = vmatpush.bf16.msra.mxu0 %v489
    %528 = vmatpush.bf16.msra.mxu0 %v488
    %529 = vmatpush.bf16.msra.mxu0 %v487
    %530 = vmatpush.bf16.msra.mxu0 %v486
    %531 = vmatmul.bf16.gmra.mxu0 %v377
    %v532 = vpop.f32.mrf.mxu0
    %v533 = vadd.f32 %v520, %v532
    %v534 = vpop.f32.mrf.mxu0
    %535 = vdwg.mxu0
    %v536 = vxor.u32 %v533, 2147483648
    %v537 = vmul.f32 %v536, 1.442695
    %v538 = vpow.pop %v537
    %v539 = vadd.f32 %v538, 1.0
    %v540 = vrcp.pop %v539
    %v541 = vmul.f32 %v539, %v540
    %v542 = vsub.f32 1.0, %v541
    %v543 = vmul.f32 %v540, %v542
    %v544 = vadd.f32 %v540, %v543
    %vm545 = vweird.f32 %v539
    %vm546 = vweird.f32 %v540
    %vm547 = vmor %vm545, %vm546
    %v548 = vsel %vm547, %v540, %v544
    %v549 = vand.u32 2147483647, %v539
    %vm550 = vcmp.eq.f32.partialorder %v549, 8.507059e+37
    %v551 = vand.u32 %v539, 2147483648
    %v552 = vor.u32 1.1754944e-38, %v551
    %v553 = vsel %vm550, %v552, %v548
    %v554 = vmul.f32 1.0, %v553
    %v555 = vmul.f32 %v533, %v554
    %v556 = vpack.c.bf16 %v555, %v555
    %v557 = vld [vmem:[#allocation5] sm:$0xf]
    %v558 = vld [vmem:[#allocation5 + $0x4] sm:$0xf]
    %v559 = vld [vmem:[#allocation5 + $0x8] sm:$0xf]
    %v560 = vld [vmem:[#allocation5 + $0xc] sm:$0xf]
    %v561 = vld [vmem:[#allocation5 + $0x10] sm:$0xf]
    %v562 = vld [vmem:[#allocation5 + $0x14] sm:$0xf]
    %v563 = vld [vmem:[#allocation5 + $0x18] sm:$0xf]
    %v564 = vld [vmem:[#allocation5 + $0x1c] sm:$0xf]
    %v565 = vld [vmem:[#allocation5 + $0x20] sm:$0xf]
    %v566 = vld [vmem:[#allocation5 + $0x24] sm:$0xf]
    %v567 = vld [vmem:[#allocation5 + $0x28] sm:$0xf]
    %v568 = vld [vmem:[#allocation5 + $0x2c] sm:$0xf]
    %v569 = vld [vmem:[#allocation5 + $0x30] sm:$0xf]
    %v570 = vld [vmem:[#allocation5 + $0x34] sm:$0xf]
    %v571 = vld [vmem:[#allocation5 + $0x38] sm:$0xf]
    %v572 = vld [vmem:[#allocation5 + $0x3c] sm:$0xf]
    %v573 = vld [vmem:[%s5] sm:$0x1]
    %v575 = vperm.slane %v573, 0
    %v593 = vunpack.c.l.b16 %v557
    %v594 = vunpack.c.l.b16 %v558
    %v595 = vunpack.c.l.b16 %v559
    %v596 = vunpack.c.l.b16 %v560
    %v597 = vunpack.c.l.b16 %v561
    %v598 = vunpack.c.l.b16 %v562
    %v599 = vunpack.c.l.b16 %v563
    %v600 = vunpack.c.l.b16 %v564
    %v601 = vunpack.c.l.b16 %v565
    %v602 = vunpack.c.l.b16 %v566
    %v603 = vunpack.c.l.b16 %v567
    %v604 = vunpack.c.l.b16 %v568
    %v605 = vunpack.c.l.b16 %v569
    %v606 = vunpack.c.l.b16 %v570
    %v607 = vunpack.c.l.b16 %v571
    %v608 = vunpack.c.l.b16 %v572
    %v609 = vpack.c.b16 %v594, %v593
    %v610 = vpack.c.b16 %v596, %v595
    %v611 = vpack.c.b16 %v598, %v597
    %v612 = vpack.c.b16 %v600, %v599
    %v613 = vpack.c.b16 %v602, %v601
    %v614 = vpack.c.b16 %v604, %v603
    %v615 = vpack.c.b16 %v606, %v605
    %v616 = vpack.c.b16 %v608, %v607
    %625 = vmatpush.bf16.msra.mxu0 %v616
    %626 = vmatpush.bf16.msra.mxu0 %v615
    %627 = vmatpush.bf16.msra.mxu0 %v614
    %628 = vmatpush.bf16.msra.mxu0 %v613
    %629 = vmatpush.bf16.msra.mxu0 %v612
    %630 = vmatpush.bf16.msra.mxu0 %v611
    %631 = vmatpush.bf16.msra.mxu0 %v610
    %632 = vmatpush.bf16.msra.mxu0 %v609
    %633 = vmatmul.bf16.gmra.mxu0 %v556
    %v634 = vpop.f32.mrf.mxu0
    %v635 = vadd.f32 %v575, %v634
    %v636 = vpop.f32.mrf.mxu0
    %637 = vdwg.mxu0
    %638 = vst [vmem:[#allocation7] sm:$0xff] %v635
    // Predicated region
    $region34: #{tpu_custom_call.1} parent=1 // pred_check
      _
    $region35: #{tpu_custom_call.1} parent=1 // pred_check_branch
      %640 = sbr.rel (0) target = $region37
    $region36: #{tpu_custom_call.1} parent=1 // pred_region
      %642 = vsyncadd [#allocation4], 0
      %s644 = sshll.u32 [#allocation7], 4
      %s645 = int_to_ptr.vmem [resolvable:$true] %s644
      %s646 = sshll.u32 %s6, 4
      %s647 = int_to_ptr.hbm [resolvable:$true] %s646
      %649 = dma.vmem_to_hbm [thread:$0]  %s645, 128, %s647, [#allocation4]
    $region37: #{tpu_custom_call.1} parent=1 // pred_fallthru
      _
    // Predicated region
    $region38: #{tpu_custom_call.1} parent=1 // pred_check
      _
    $region39: #{tpu_custom_call.1} parent=1 // pred_check_branch
      %651 = sbr.rel (0) target = $region41
    $region40: #{tpu_custom_call.1} parent=1 // pred_region
      %653 = dma.done [#allocation4], 128
    $region41: #{tpu_custom_call.1} parent=1 // pred_fallthru
      _
    %654 = vsyncpa [#allocation3], 1
    %655 = vsyncpa [#allocation6], 1
    %656 = vsyncpa [#allocation4], 1

</llo_original>
